<compile_context>
chip_gen: v7x
topology: tpu7x:2x2x1
jax: 0.10.0
libtpu: 0.0.40
codegen_flags: <defaults>
</compile_context>

<pallas_src>
import functools

import numpy as np

import jax
import jax.numpy as jnp
from jax.experimental import pallas as pl
from jax.experimental.pallas import tpu as pltpu


def _cdiv(a, b):
    return -(-a // b)


def _masked_conv_kernel(x_ref, t_ref, b_ref, o_ref, *, imgs_per_chunk):
    # x_ref: (Nb, Ht, K)        bf16, already im2row'ed over the active kernel rows
    # t_ref: (K, W*Cout)        bf16 fused Toeplitz-expanded masked weights
    # b_ref: (1, W*Cout)        f32 bias tiled over W
    # o_ref: (Nb, Ht, W*Cout)   output, lane-dense last dim
    Nb, Ht, K = x_ref.shape
    WCout = o_ref.shape[2]

    t = t_ref[...]            # whole (K, W*Cout) operand, reused by every chunk
    bias = b_ref[...]         # (1, W*Cout) f32, broadcast hoisted once

    # M-chunked single big-K matmul: one MXU dot per chunk, bias added once,
    # result stored immediately (bounds the live f32 accumulator).
    for c0 in range(0, Nb, imgs_per_chunk):
        nimg = min(Nb - c0, imgs_per_chunk)
        lhs = x_ref[pl.ds(c0, nimg)].reshape(nimg * Ht, K)
        acc = jnp.dot(lhs, t, preferred_element_type=jnp.float32)
        acc = acc + bias
        o_ref[pl.ds(c0, nimg)] = acc.reshape(nimg, Ht, WCout).astype(o_ref.dtype)


def masked_convolution(x_nchw, weight_oihw, bias, mask, dilation=1,
                       compute_dtype=jnp.bfloat16):
    """Forward pass of MaskedConvolution.

    x_nchw:      (N, Cin, H, W)
    weight_oihw: (Cout, Cin, KH, KW)
    bias:        (Cout,)
    mask:        (KH, KW)  -- must be a static (host-known) array
    returns:     (N, Cout, H, W)
    """
    assert dilation == 1, "only dilation=1 implemented"  # TODO(synk): dilated taps
    N, Cin, H, W = x_nchw.shape
    Cout, _, KH, KW = weight_oihw.shape
    if KH % 2 == 0 or KW % 2 == 0:
        # TODO(synk): even kernels produce H-1/W-1 outputs under (k-1)//2 padding.
        raise NotImplementedError("only odd kernel sizes are supported")
    ph, pw = (KH - 1) // 2, (KW - 1) // 2
    out_dtype = x_nchw.dtype

    # ---- static mask -> skip fully-masked kernel rows at trace time ---------
    try:
        mask_np = np.asarray(mask, dtype=np.float32)
    except Exception as e:  # traced mask under jit
        raise ValueError("MaskedConvolution requires a static (host-known) mask") from e
    active_rows = tuple(int(kh) for kh in range(KH) if np.any(mask_np[kh] != 0.0))
    if not active_rows:  # degenerate: everything masked -> bias only
        return jnp.broadcast_to(
            bias.astype(out_dtype)[None, :, None, None], (N, Cout, H, W))
    KHa = len(active_rows)

    K = KHa * W * Cin
    WCout = W * Cout
    cbytes = jnp.dtype(compute_dtype).itemsize
    obytes = jnp.dtype(out_dtype).itemsize

    # ---- parameter prep (tiny tensors, trace time) ---------------------------
    # `self.conv.weight.data *= self.mask`
    w_masked = weight_oihw * jnp.asarray(mask_np)[None, None, :, :]
    w_hwio = jnp.transpose(w_masked, (2, 3, 1, 0))            # (KH, KW, Cin, Cout)
    w_act = w_hwio[jnp.asarray(active_rows), ...]              # (KHa, KW, Cin, Cout)

    # Toeplitz over the *unpadded* W axis (zero padding is implicit: out-of-range
    # taps simply have no matching input column):  S[kw, v, w] = (v == w + kw - pw)
    v_idx = np.arange(W)[None, :, None]
    w_idx = np.arange(W)[None, None, :]
    kw_idx = np.arange(KW)[:, None, None]
    S = (v_idx == w_idx + kw_idx - pw).astype(np.float32)      # (KW, W, W)
    T = jnp.einsum('kvw,akio->aviwo', jnp.asarray(S), w_act.astype(jnp.float32))
    T = T.reshape(K, WCout).astype(compute_dtype)              # fused big-K operand

    b_tiled = jnp.tile(bias.astype(jnp.float32), (W,)).reshape(1, WCout)

    # ---- input prep: NCHW -> H-padded, im2row over active rows, lane-dense --
    # TODO(synk): accept/emit NHWC at the model boundary to drop these
    # transpose HBM passes entirely.
    x_nhwc = jnp.transpose(x_nchw, (0, 2, 3, 1)).astype(compute_dtype)  # (N,H,W,Cin)
    x_pad = jnp.pad(x_nhwc, ((0, 0), (ph, ph), (0, 0), (0, 0)))         # (N,H+2ph,W,Cin)
    # Shifted-row concat: everything output row h needs is in x_flat[:, h, :],
    # so H can be tiled with no halo and the kernel needs no misaligned slices.
    x_rows = jnp.stack([x_pad[:, kh:kh + H] for kh in active_rows], axis=2)
    x_flat = x_rows.reshape(N, H, K)                                    # (N, H, K)

    # ---- generation-aware block sizing --------------------------------------
    try:
        phys_vmem = int(pltpu.get_tpu_info().vmem_capacity_bytes)
    except Exception:
        phys_vmem = 64 << 20                 # v7x has the smallest VMEM; be safe
    budget = phys_vmem // 4                  # per-step working-set target

    CHUNK_ROWS = 512                         # in-kernel M-tile (bounds f32 acc)
    t_bytes = K * WCout * cbytes
    fixed = 2 * t_bytes + 2 * WCout * 4 + CHUNK_ROWS * WCout * 4

    def _block_bytes(nb, ht):                # 2x double-buffered in + out blocks
        return 2 * nb * ht * K * cbytes + 2 * nb * ht * WCout * obytes

    h_tiles = sorted({H} | {t for t in range(8, H, 8) if H % t == 0}, reverse=True)

    Ht, Nb = h_tiles[-1], 1                  # fallback if nothing fits the budget
    for ht in h_tiles:
        if fixed + _block_bytes(1, ht) <= budget:
            Ht = ht
            Nb = max(1, min(N, (budget - fixed) // _block_bytes(1, ht)))
            break

    # Keep >= MIN_STEPS parallel grid steps when shapes allow (v7x: 2 TCs).
    MIN_STEPS = 4

    def _steps(nb, ht):
        return _cdiv(N, nb) * (H // ht)

    gH0 = H // Ht
    if gH0 < MIN_STEPS:
        Nb = max(1, min(Nb, (N * gH0) // MIN_STEPS))
    if _steps(Nb, Ht) < MIN_STEPS:
        for ht in h_tiles:                   # largest H tile that reaches MIN_STEPS
            if ht < Ht and _steps(Nb, ht) >= MIN_STEPS:
                Ht = ht
                break

    gN, gH = _cdiv(N, Nb), H // Ht
    N_pad = gN * Nb
    if N_pad > N:                            # no N % Nb requirement: pad the batch
        x_flat = jnp.pad(x_flat, ((0, N_pad - N), (0, 0), (0, 0)))

    imgs_per_chunk = max(1, CHUNK_ROWS // Ht)
    need = fixed + _block_bytes(Nb, Ht) + (2 << 20)
    vmem_limit = int(min(phys_vmem - (4 << 20), max(need, 16 << 20)))

    kernel = functools.partial(_masked_conv_kernel, imgs_per_chunk=imgs_per_chunk)

    # TODO(synk): on v6e/v7x, packing two spatial rows per matmul row would fill
    # the full 256-lane MXU width (here W*Cout = 128) if production shapes allow.
    out_flat = pl.pallas_call(
        kernel,
        out_shape=jax.ShapeDtypeStruct((N_pad, H, WCout), out_dtype),
        grid_spec=pltpu.PrefetchScalarGridSpec(
            num_scalar_prefetch=0,
            grid=(gN, gH),
            in_specs=[
                pl.BlockSpec((Nb, Ht, K), lambda n, h: (n, h, 0)),
                pl.BlockSpec((K, WCout), lambda n, h: (0, 0)),
                pl.BlockSpec((1, WCout), lambda n, h: (0, 0)),
            ],
            out_specs=pl.BlockSpec((Nb, Ht, WCout), lambda n, h: (n, h, 0)),
        ),
        compiler_params=pltpu.CompilerParams(
            dimension_semantics=("parallel", "parallel"),
            vmem_limit_bytes=vmem_limit,
        ),
    )(x_flat, T, b_tiled)

    # (N_pad, H, W*Cout) -> (N, H, W, Cout) -> NCHW
    out = out_flat[:N].reshape(N, H, W, Cout)
    return jnp.transpose(out, (0, 3, 1, 2))


if __name__ == "__main__":
    # Small shapes consistent with the module's forward.
    N, Cin, Cout, H, W = 2, 4, 8, 16, 16
    KH = KW = 3

    key = jax.random.PRNGKey(0)
    kx, kw, kb = jax.random.split(key, 3)

    x = jax.random.normal(kx, (N, Cin, H, W), dtype=jnp.float32)
    weight = jax.random.normal(kw, (Cout, Cin, KH, KW), dtype=jnp.float32) * 0.1
    bias = jax.random.normal(kb, (Cout,), dtype=jnp.float32) * 0.1

    # PixelCNN type-'A' mask: everything strictly before the center pixel.
    mask = jnp.ones((KH, KW), dtype=jnp.float32)
    mask = mask.at[KH // 2, KW // 2:].set(0.0)
    mask = mask.at[KH // 2 + 1:, :].set(0.0)

    out = masked_convolution(x, weight, bias, mask)
    out = jax.block_until_ready(out)
    assert out.shape == (N, Cout, H, W)

    # Reference: XLA conv on the SAME bf16-rounded inputs with f32 accumulation
    # (kernel uses a bf16 data path + f32 accumulate).
    ph = (KH - 1) // 2
    pw = (KW - 1) // 2
    x_bf = x.astype(jnp.bfloat16).astype(jnp.float32)
    w_bf = (weight * mask[None, None]).astype(jnp.bfloat16).astype(jnp.float32)
    ref = jax.lax.conv_general_dilated(
        x_bf, w_bf, window_strides=(1, 1), padding=((ph, ph), (pw, pw)),
        dimension_numbers=("NCHW", "OIHW", "NCHW"),
    ) + bias[None, :, None, None]
    assert jnp.allclose(out, ref, atol=2e-3, rtol=2e-3), float(
        jnp.max(jnp.abs(out - ref)))

    print("KERNEL_OK")
</pallas_src>

<mosaic_0001>
module attributes {stable_mosaic.version = 11 : i64} {
  func.func @_masked_conv_kernel(%arg0: i32, %arg1: i32, %arg2: memref<1x8x128xbf16, #tpu.memory_space<vmem>>, %arg3: memref<128x128xbf16, #tpu.memory_space<vmem>>, %arg4: memref<1x128xf32, #tpu.memory_space<vmem>>, %arg5: memref<1x8x128xf32, #tpu.memory_space<vmem>>) attributes {dimension_semantics = [#tpu.dimension_semantics<parallel>, #tpu.dimension_semantics<parallel>], iteration_bounds = array<i64: 2, 2>, scalar_prefetch = 0 : i64, scratch_operands = 0 : i64, tpu.core_type = #tpu.core_type<tc>, window_params = [{transform_indices = @transform_0, window_bounds = array<i64: 1, 8, 128>}, {pipeline_mode = #tpu.pipeline_mode<synchronous>, transform_indices = @transform_1, window_bounds = array<i64: 128, 128>}, {pipeline_mode = #tpu.pipeline_mode<synchronous>, transform_indices = @transform_2, window_bounds = array<i64: 1, 128>}, {transform_indices = @transform_3, window_bounds = array<i64: 1, 8, 128>}]} {
    %c0 = arith.constant 0 : index
    %c0_0 = arith.constant 0 : index
    %0 = vector.load %arg3[%c0, %c0_0] : memref<128x128xbf16, #tpu.memory_space<vmem>>, vector<128x128xbf16>
    %c0_1 = arith.constant 0 : index
    %c0_2 = arith.constant 0 : index
    %1 = vector.load %arg4[%c0_1, %c0_2] : memref<1x128xf32, #tpu.memory_space<vmem>>, vector<1x128xf32>
    %c0_3 = arith.constant 0 : index
    %c0_4 = arith.constant 0 : index
    %c0_5 = arith.constant 0 : index
    %2 = vector.load %arg2[%c0_3, %c0_4, %c0_5] : memref<1x8x128xbf16, #tpu.memory_space<vmem>>, vector<1x8x128xbf16>
    %3 = vector.shape_cast %2 : vector<1x8x128xbf16> to vector<8x128xbf16>
    %cst = arith.constant dense<0.000000e+00> : vector<8x128xf32>
    %4 = tpu.matmul %3, %0, %cst {dimension_numbers = #tpu.dot_dimension_numbers<[1], [0], [0], [1], [0, 0, 1, 1], [], []>} : vector<8x128xbf16>, vector<128x128xbf16>, vector<8x128xf32> -> vector<8x128xf32>
    %5 = vector.broadcast %1 : vector<1x128xf32> to vector<8x128xf32>
    %6 = arith.addf %4, %5 : vector<8x128xf32>
    %7 = vector.shape_cast %6 : vector<8x128xf32> to vector<1x8x128xf32>
    %c0_6 = arith.constant 0 : index
    %c0_7 = arith.constant 0 : index
    %c0_8 = arith.constant 0 : index
    %8 = vector.load %arg5[%c0_6, %c0_7, %c0_8] : memref<1x8x128xf32, #tpu.memory_space<vmem>>, vector<1x8x128xf32>
    tpu.vector_store %arg5[%c0_6, %c0_7, %c0_8], %7 {strides = array<i32>} : memref<1x8x128xf32, #tpu.memory_space<vmem>>, vector<1x8x128xf32>,
    return
  }
  func.func @transform_0(%arg0: i32, %arg1: i32) -> (i32, i32, i32) {
    %c0_i32 = arith.constant 0 : i32
    %c0_i32_0 = arith.constant 0 : i32
    return %arg0, %arg1, %c0_i32 : i32, i32, i32
  }
  func.func @transform_1(%arg0: i32, %arg1: i32) -> (i32, i32) {
    %c0_i32 = arith.constant 0 : i32
    %c0_i32_0 = arith.constant 0 : i32
    %c0_i32_1 = arith.constant 0 : i32
    return %c0_i32, %c0_i32_0 : i32, i32
  }
  func.func @transform_2(%arg0: i32, %arg1: i32) -> (i32, i32) {
    %c0_i32 = arith.constant 0 : i32
    %c0_i32_0 = arith.constant 0 : i32
    %c0_i32_1 = arith.constant 0 : i32
    return %c0_i32, %c0_i32_0 : i32, i32
  }
  func.func @transform_3(%arg0: i32, %arg1: i32) -> (i32, i32, i32) {
    %c0_i32 = arith.constant 0 : i32
    %c0_i32_0 = arith.constant 0 : i32
    return %arg0, %arg1, %c0_i32 : i32, i32, i32
  }
}

</mosaic_0001>

<llo_original>
// kernel: tpu_custom_call.1
$region0: #{tpu_custom_call.1}
  #allocation0 [shape = 'u32[]', space=smem, size = 0x4, offset = 0x4, fixed_abs, tag = 'smem constant byte address 0x4 - core index']
  #allocation1 [shape = 'u32[144,128]{1,0:T(1,128)}', space=vmem, size = 0x12000, scoped, tag = 'internal scratch']
  %s0 = inlined_call_operand.hbm [shape: bf16[2,16,128], index: 0, kind: input, shape index: {}]
  %s1 = inlined_call_operand.hbm [shape: bf16[128,128], index: 1, kind: input, shape index: {}]
  %s2 = inlined_call_operand.vmem [shape: f32[1,128], index: 2, kind: input, shape index: {}]
  %s3 = inlined_call_operand.hbm [shape: f32[2,16,128], index: 3, kind: output, shape index: {}]
  %s4 = sld [smem:[#allocation0]]
  $region53: #{tpu_custom_call.1} parent=0
    _
  %s6 = ssub.s32 1, %s4
  %s7 = scalar_select 0, %s6, %s4
  $region1: #{tpu_custom_call.1} parent=0
    #allocation2 [shape = 'u8[4096]{0}', space=vmem, size = 0x1000, scoped, tag = 'input window, operand 0']
    #allocation3 [shape = 's32[2]{0}', space=sflag, size = 0x8, scoped, tag = 'scoped memory for tpu_custom_call.1']
    #allocation4 [shape = 's32[2]{0}', space=sflag, size = 0x8, scoped, tag = 'scoped memory for tpu_custom_call.1']
    #allocation5 [shape = 'u8[32768]{0}', space=vmem, size = 0x8000, scoped, tag = 'input window, operand 1, single buffered']
    #allocation6 [shape = 's32[1]{0}', space=sflag, size = 0x4, scoped, tag = 'scoped memory for tpu_custom_call.1']
    #allocation7 [shape = 'u8[8192]{0}', space=vmem, size = 0x2000, scoped, tag = 'output window, operand 0']
    %8 = vsyncpa [#allocation3], 0
    %s9 = scalar_lea.sflag [#allocation3], 1
    %10 = vsyncpa %s9, 0
    %11 = vsyncpa [#allocation6], 0
    %12 = vsyncpa [#allocation4], 0
    %s13 = scalar_lea.sflag [#allocation4], 1
    %14 = vsyncpa %s13, 0
    loop: start=0, step=1, limit=6
    $region2: #{tpu_custom_call.1} parent=1 // loop_pre_header
      _
    $region3: #{tpu_custom_call.1} parent=1 // loop_header
      %s16 = sphi 0, %s20
      %p17 = scmp.ge.s32.totalorder %s16, 6
      %s23 = sphi 0, %s35
      %s24 = sphi 0, %s31
      %s25 = sphi 0, %s23
      %s26 = sphi 0, %s24
      %s27 = sphi 0, %s25
      %s28 = sphi 0, %s26
      %s40 = sphi 0, %s42
      %s43 = sphi 0, %s40
      %s44 = sphi 0, %s43
      %s60 = sphi 0, %s44
      %s64 = sphi 0, %s64
      %s66 = sphi 0, %s64
      %s67 = sphi 0, %s66
      %s81 = sphi 0, %s67
      %s85 = sphi 0, %s85
      %s87 = sphi 0, %s85
      %s88 = sphi 0, %s87
      %s102 = sphi 0, %s88
      %s110 = sphi 0, %s112
      %s113 = sphi 0, %s110
      %s114 = sphi 0, %s113
      %s130 = sphi 0, %s114
    $region4: #{tpu_custom_call.1} parent=1 // loop_header_branch
      %19 = sbr.rel (%p17) target = $region8
    $region5: #{tpu_custom_call.1} parent=1 // loop_body
      %s21 = ssub.s32 %s16, 1
      %s22 = ssub.s32 %s16, 2
      %s29 = sadd.s32 1, %s24
      %p30 = scmp.ge.s32.totalorder %s29, 2
      %s31 = scalar_select %p30, 0, %s29
      %s32 = sadd.s32 1, %s23
      %s33 = scalar_select %p30, %s32, %s23
      %p34 = scmp.ge.s32.totalorder %s33, 2
      %s35 = scalar_select %p34, 0, %s33
      %s36 = ssub.s32 %s23, %s35
      %s37 = ssub.s32 %s24, %s31
      %s38 = sor.u32 %s36, %s37
      %p39 = scmp.eq.s32.totalorder %s38, 0
      %s41 = sadd.s32 %s40, 1
      %s42 = scalar_select %p39, %s40, %s41
      %p45 = pneg %p39
      %p46 = scmp.eq.s32.totalorder %s16, 3
      %p47 = por %p45, %p46
      %p48 = scmp.ne.s32.totalorder %s40, %s43
      %p49 = scmp.eq.s32.totalorder %s16, 0
      %p50 = por %p48, %p49
      %p51 = scmp.ne.s32.totalorder %s40, %s43
      %p52 = scmp.eq.s32.totalorder %s21, 3
      %p53 = por %p51, %p52
      %p54 = scmp.ne.s32.totalorder %s43, %s44
      %p55 = scmp.eq.s32.totalorder %s21, 0
      %p56 = por %p54, %p55
      %p57 = scmp.ne.s32.totalorder %s43, %s44
      %p58 = scmp.eq.s32.totalorder %s22, 3
      %p59 = por %p57, %p58
      %p61 = scmp.ne.s32.totalorder %s44, %s60
      %p62 = scmp.eq.s32.totalorder %s22, 0
      %p63 = por %p61, %p62
      %s65 = sadd.s32 %s64, 1
      %p68 = scmp.eq.s32.totalorder %s16, 3
      %p69 = scmp.ne.s32.totalorder %s64, %s66
      %p70 = scmp.eq.s32.totalorder %s16, 0
      %p71 = por %p69, %p70
      %p72 = scmp.ne.s32.totalorder %s64, %s66
      %p73 = scmp.eq.s32.totalorder %s21, 3
      %p74 = por %p72, %p73
      %p75 = scmp.ne.s32.totalorder %s66, %s67
      %p76 = scmp.eq.s32.totalorder %s21, 0
      %p77 = por %p75, %p76
      %p78 = scmp.ne.s32.totalorder %s66, %s67
      %p79 = scmp.eq.s32.totalorder %s22, 3
      %p80 = por %p78, %p79
      %p82 = scmp.ne.s32.totalorder %s67, %s81
      %p83 = scmp.eq.s32.totalorder %s22, 0
      %p84 = por %p82, %p83
      %s86 = sadd.s32 %s85, 1
      %p89 = scmp.eq.s32.totalorder %s16, 3
      %p90 = scmp.ne.s32.totalorder %s85, %s87
      %p91 = scmp.eq.s32.totalorder %s16, 0
      %p92 = por %p90, %p91
      %p93 = scmp.ne.s32.totalorder %s85, %s87
      %p94 = scmp.eq.s32.totalorder %s21, 3
      %p95 = por %p93, %p94
      %p96 = scmp.ne.s32.totalorder %s87, %s88
      %p97 = scmp.eq.s32.totalorder %s21, 0
      %p98 = por %p96, %p97
      %p99 = scmp.ne.s32.totalorder %s87, %s88
      %p100 = scmp.eq.s32.totalorder %s22, 3
      %p101 = por %p99, %p100
      %p103 = scmp.ne.s32.totalorder %s88, %s102
      %p104 = scmp.eq.s32.totalorder %s22, 0
      %p105 = por %p103, %p104
      %s106 = ssub.s32 %s23, %s35
      %s107 = ssub.s32 %s24, %s31
      %s108 = sor.u32 %s106, %s107
      %p109 = scmp.eq.s32.totalorder %s108, 0
      %s111 = sadd.s32 %s110, 1
      %s112 = scalar_select %p109, %s110, %s111
      %p115 = pneg %p109
      %p116 = scmp.eq.s32.totalorder %s16, 3
      %p117 = por %p115, %p116
      %p118 = scmp.ne.s32.totalorder %s110, %s113
      %p119 = scmp.eq.s32.totalorder %s16, 0
      %p120 = por %p118, %p119
      %p121 = scmp.ne.s32.totalorder %s110, %s113
      %p122 = scmp.eq.s32.totalorder %s21, 3
      %p123 = por %p121, %p122
      %p124 = scmp.ne.s32.totalorder %s113, %s114
      %p125 = scmp.eq.s32.totalorder %s21, 0
      %p126 = por %p124, %p125
      %p127 = scmp.ne.s32.totalorder %s113, %s114
      %p128 = scmp.eq.s32.totalorder %s22, 3
      %p129 = por %p127, %p128
      %p131 = scmp.ne.s32.totalorder %s114, %s130
      %p132 = scmp.eq.s32.totalorder %s22, 0
      %p133 = por %p131, %p132
      %p134 = scmp.le.s32.totalorder 1, %s16
      %p135 = scmp.lt.s32.totalorder %s16, 5
      %p136 = pnand %p134, %p135
      %p137 = pneg %p136
      // Predicated region
      $region9: #{tpu_custom_call.1} parent=5 // pred_check
        _
      $region10: #{tpu_custom_call.1} parent=5 // pred_check_branch
        %139 = sbr.rel (%p136) target = $region12
      $region11: #{tpu_custom_call.1} parent=5 // pred_region
        %s140 = ssub.s32 %s16, 1
        // Predicated region
        $region13: #{tpu_custom_call.1} parent=11 // pred_check
          %p141 = pneg %p77
        $region14: #{tpu_custom_call.1} parent=11 // pred_check_branch
          %143 = sbr.rel (%p141) target = $region16
        $region15: #{tpu_custom_call.1} parent=11 // pred_region
          %s145 = ssub.s32 1024, 1024
          %146 = vsyncadd [#allocation6], %s145
          %s147 = sshll.u32 [#allocation5], 4
          %s148 = int_to_ptr.vmem [resolvable:$true] %s147
          %153 = dma.hbm_to_vmem [thread:$0]  %s1, 1024, %s148, [#allocation6], 64, 64, 4
        $region16: #{tpu_custom_call.1} parent=11 // pred_fallthru
          _
        // Predicated region
        $region17: #{tpu_custom_call.1} parent=11 // pred_check
          %p154 = pneg %p98
        $region18: #{tpu_custom_call.1} parent=11 // pred_check_branch
          %156 = sbr.rel (%p154) target = $region20
        $region19: #{tpu_custom_call.1} parent=11 // pred_region
          _
        $region20: #{tpu_custom_call.1} parent=11 // pred_fallthru
          _
      $region12: #{tpu_custom_call.1} parent=5 // pred_fallthru
        _
      %p157 = scmp.lt.s32.totalorder %s16, 4
      // Predicated region
      $region21: #{tpu_custom_call.1} parent=5 // pred_check
        %p158 = pneg %p157
      $region22: #{tpu_custom_call.1} parent=5 // pred_check_branch
        %160 = sbr.rel (%p158) target = $region24
      $region23: #{tpu_custom_call.1} parent=5 // pred_region
        // Predicated region
        $region25: #{tpu_custom_call.1} parent=23 // pred_check
          %p161 = pneg %p50
        $region26: #{tpu_custom_call.1} parent=23 // pred_check_branch
          %163 = sbr.rel (%p161) target = $region28
        $region27: #{tpu_custom_call.1} parent=23 // pred_region
          %s164 = sand.u32 %s40, 1
          %s165 = scalar_lea.sflag [#allocation3], %s164
          %s166 = sand.u32 %s40, 1
          %s167 = smul.addr %s166, 4
          %s168 = scalar_lea.vmem [#allocation2], %s167
          %s170 = ssub.s32 64, 64
          %171 = vsyncadd %s165, %s170
          %s172 = smul.addr %s23, 2
          %s173 = sadd.s32 %s24, %s172
          %s174 = smul.addr %s173, 64
          %s175 = scalar_lea.hbm %s0, %s174
          %s177 = sshll.u32 %s168, 4
          %s178 = int_to_ptr.vmem [resolvable:$true] %s177
          %180 = dma.hbm_to_vmem [thread:$0]  %s175, 64, %s178, %s165
        $region28: #{tpu_custom_call.1} parent=23 // pred_fallthru
          _
      $region24: #{tpu_custom_call.1} parent=5 // pred_fallthru
        _
      %p181 = scmp.le.s32.totalorder 1, %s16
      %p182 = scmp.lt.s32.totalorder %s16, 5
      %p183 = pnand %p181, %p182
      %p184 = pneg %p183
      // Predicated region
      $region29: #{tpu_custom_call.1} parent=5 // pred_check
        _
      $region30: #{tpu_custom_call.1} parent=5 // pred_check_branch
        %186 = sbr.rel (%p183) target = $region32
      $region31: #{tpu_custom_call.1} parent=5 // pred_region
        %s187 = ssub.s32 %s16, 1
        %s188 = sand.u32 %s43, 1
        %s189 = scalar_lea.sflag [#allocation3], %s188
        %s190 = sand.u32 %s43, 1
        %s191 = smul.addr %s190, 4
        %s192 = scalar_lea.vmem [#allocation2], %s191
        // Predicated region
        $region33: #{tpu_custom_call.1} parent=31 // pred_check
          %p193 = pneg %p56
        $region34: #{tpu_custom_call.1} parent=31 // pred_check_branch
          %195 = sbr.rel (%p193) target = $region36
        $region35: #{tpu_custom_call.1} parent=31 // pred_region
          %196 = dma.done %s189, 64
        $region36: #{tpu_custom_call.1} parent=31 // pred_fallthru
          _
        // Predicated region
        $region37: #{tpu_custom_call.1} parent=31 // pred_check
          %p197 = pneg %p77
        $region38: #{tpu_custom_call.1} parent=31 // pred_check_branch
          %199 = sbr.rel (%p197) target = $region40
        $region39: #{tpu_custom_call.1} parent=31 // pred_region
          %200 = dma.done [#allocation6], 1024
        $region40: #{tpu_custom_call.1} parent=31 // pred_fallthru
          _
        %s201 = sand.u32 %s43, 1
        %s202 = scalar_lea.sflag [#allocation3], %s201
        %s203 = sand.u32 %s43, 1
        %s204 = smul.addr %s203, 4
        %s205 = scalar_lea.vmem [#allocation2], %s204
        %p206 = pneg %p56
        %p207 = pneg %p53
        %p208 = pneg %p77
        %p209 = pneg %p74
        %p210 = pneg %p98
        %p211 = pneg %p95
        %p212 = pneg %p126
        %p213 = pneg %p123
        %s214 = sand.u32 %s113, 1
        %s215 = scalar_lea.sflag [#allocation4], %s214
        %s216 = sand.u32 %s113, 1
        %s217 = smul.addr %s216, 8
        %s218 = scalar_lea.vmem [#allocation7], %s217
        %v220 = vld [vmem:[#allocation5] sm:$0xf]
        %v221 = vld [vmem:[#allocation5 + $0x4] sm:$0xf]
        %v222 = vld [vmem:[#allocation5 + $0x8] sm:$0xf]
        %v223 = vld [vmem:[#allocation5 + $0xc] sm:$0xf]
        %v224 = vld [vmem:[#allocation5 + $0x10] sm:$0xf]
        %v225 = vld [vmem:[#allocation5 + $0x14] sm:$0xf]
        %v226 = vld [vmem:[#allocation5 + $0x18] sm:$0xf]
        %v227 = vld [vmem:[#allocation5 + $0x1c] sm:$0xf]
        %v228 = vld [vmem:[#allocation5 + $0x20] sm:$0xf]
        %v229 = vld [vmem:[#allocation5 + $0x24] sm:$0xf]
        %v230 = vld [vmem:[#allocation5 + $0x28] sm:$0xf]
        %v231 = vld [vmem:[#allocation5 + $0x2c] sm:$0xf]
        %v232 = vld [vmem:[#allocation5 + $0x30] sm:$0xf]
        %v233 = vld [vmem:[#allocation5 + $0x34] sm:$0xf]
        %v234 = vld [vmem:[#allocation5 + $0x38] sm:$0xf]
        %v235 = vld [vmem:[#allocation5 + $0x3c] sm:$0xf]
        %v236 = vld [vmem:[%s2] sm:$0x1]
        %v237 = vld [vmem:[%s192] sm:$0xf]
        %v239 = vlaneseq
        %v240 = vshrl.u32 %v239, 7
        %v241 = vsub.s32 0, %v240
        %v242 = vrot.slane %v236, %v241
        %v260 = vunpack.c.l.b16 %v220
        %v261 = vunpack.c.l.b16 %v221
        %v262 = vunpack.c.l.b16 %v222
        %v263 = vunpack.c.l.b16 %v223
        %v264 = vunpack.c.l.b16 %v224
        %v265 = vunpack.c.l.b16 %v225
        %v266 = vunpack.c.l.b16 %v226
        %v267 = vunpack.c.l.b16 %v227
        %v268 = vunpack.c.l.b16 %v228
        %v269 = vunpack.c.l.b16 %v229
        %v270 = vunpack.c.l.b16 %v230
        %v271 = vunpack.c.l.b16 %v231
        %v272 = vunpack.c.l.b16 %v232
        %v273 = vunpack.c.l.b16 %v233
        %v274 = vunpack.c.l.b16 %v234
        %v275 = vunpack.c.l.b16 %v235
        %v276 = vpack.c.b16 %v261, %v260
        %v277 = vpack.c.b16 %v263, %v262
        %v278 = vpack.c.b16 %v265, %v264
        %v279 = vpack.c.b16 %v267, %v266
        %v280 = vpack.c.b16 %v269, %v268
        %v281 = vpack.c.b16 %v271, %v270
        %v282 = vpack.c.b16 %v273, %v272
        %v283 = vpack.c.b16 %v275, %v274
        %292 = vmatprep.subr.bf16.mxu0 0
        %293 = vmatpush1.bf16.msra.mxu0 %v276
        %294 = vmatprep.subr.bf16.mxu0 0
        %295 = vmatpush1.bf16.msra.mxu0 %v277
        %296 = vmatprep.subr.bf16.mxu0 0
        %297 = vmatpush1.bf16.msra.mxu0 %v278
        %298 = vmatprep.subr.bf16.mxu0 0
        %299 = vmatpush1.bf16.msra.mxu0 %v279
        %300 = vmatprep.subr.bf16.mxu0 0
        %301 = vmatpush1.bf16.msra.mxu0 %v280
        %302 = vmatprep.subr.bf16.mxu0 0
        %303 = vmatpush1.bf16.msra.mxu0 %v281
        %304 = vmatprep.subr.bf16.mxu0 0
        %305 = vmatpush1.bf16.msra.mxu0 %v282
        %306 = vmatprep.subr.bf16.mxu0 0
        %307 = vmatpush1.bf16.msra.mxu0 %v283
        %308 = vmatprep.subr.bf16.mxu0 0
        %309 = vmatpush1.bf16.msra.mxu0 0
        %310 = vmatprep.subr.bf16.mxu0 0
        %311 = vmatpush1.bf16.msra.mxu0 0
        %312 = vmatprep.subr.bf16.mxu0 0
        %313 = vmatpush1.bf16.msra.mxu0 0
        %314 = vmatprep.subr.bf16.mxu0 0
        %315 = vmatpush1.bf16.msra.mxu0 0
        %316 = vmatprep.subr.bf16.mxu0 0
        %317 = vmatpush1.bf16.msra.mxu0 0
        %318 = vmatprep.subr.bf16.mxu0 0
        %319 = vmatpush1.bf16.msra.mxu0 0
        %320 = vmatprep.subr.bf16.mxu0 0
        %321 = vmatpush1.bf16.msra.mxu0 0
        %322 = vmatprep.subr.bf16.mxu0 0
        %323 = vmatpush1.bf16.msra.mxu0 0
        %324 = vmatprep.mubr.bf16.mxu0 0
        %325 = vmatmul.mubr.bf16.gmra.mrb[0].mxu0 %v237
        %v326 = vpop.f32.mrb[0].mxu0
        %v327 = vadd.f32 %v242, %v326
        %v328 = vpop.f32.mrb[0].mxu0
        %v329 = vpop.f32.mrb[0].mxu0
        %v330 = vpop.f32.mrb[0].mxu0
        %331 = vdwg.mxu0
        %332 = vst [vmem:[%s218] sm:$0xff] %v327
        %s333 = sand.u32 %s113, 1
        %s334 = scalar_lea.sflag [#allocation4], %s333
        %s335 = sand.u32 %s113, 1
        %s336 = smul.addr %s335, 8
        %s337 = scalar_lea.vmem [#allocation7], %s336
        // Predicated region
        $region41: #{tpu_custom_call.1} parent=31 // pred_check
          %p338 = pneg %p123
        $region42: #{tpu_custom_call.1} parent=31 // pred_check_branch
          %340 = sbr.rel (%p338) target = $region44
        $region43: #{tpu_custom_call.1} parent=31 // pred_region
          %s342 = ssub.s32 128, 128
          %343 = vsyncadd %s334, %s342
          %s344 = smul.addr %s25, 2
          %s345 = sadd.s32 %s26, %s344
          %s346 = smul.addr %s345, 128
          %s347 = scalar_lea.hbm %s3, %s346
          %s349 = sshll.u32 %s337, 4
          %s350 = int_to_ptr.vmem [resolvable:$true] %s349
          %352 = dma.vmem_to_hbm [thread:$0]  %s350, 128, %s347, %s334
        $region44: #{tpu_custom_call.1} parent=31 // pred_fallthru
          _
      $region32: #{tpu_custom_call.1} parent=5 // pred_fallthru
        _
      %p353 = scmp.le.s32.totalorder 2, %s16
      // Predicated region
      $region45: #{tpu_custom_call.1} parent=5 // pred_check
        %p354 = pneg %p353
      $region46: #{tpu_custom_call.1} parent=5 // pred_check_branch
        %356 = sbr.rel (%p354) target = $region48
      $region47: #{tpu_custom_call.1} parent=5 // pred_region
        %s357 = ssub.s32 %s16, 2
        // Predicated region
        $region49: #{tpu_custom_call.1} parent=47 // pred_check
          %p358 = pneg %p129
        $region50: #{tpu_custom_call.1} parent=47 // pred_check_branch
          %360 = sbr.rel (%p358) target = $region52
        $region51: #{tpu_custom_call.1} parent=47 // pred_region
          %s361 = sand.u32 %s114, 1
          %s362 = scalar_lea.sflag [#allocation4], %s361
          %s363 = sand.u32 %s114, 1
          %s364 = smul.addr %s363, 8
          %s365 = scalar_lea.vmem [#allocation7], %s364
          %366 = dma.done %s362, 128
        $region52: #{tpu_custom_call.1} parent=47 // pred_fallthru
          _
      $region48: #{tpu_custom_call.1} parent=5 // pred_fallthru
        _
    $region6: #{tpu_custom_call.1} parent=1 // loop_footer
      %s20 = sadd.s32 1, %s16
    $region7: #{tpu_custom_call.1} parent=1 // loop_footer_branch
      %15 = sbr.rel target = $region3
    $region8: #{tpu_custom_call.1} parent=1 // loop_exit
      _
    %367 = vsyncpa [#allocation3], 1
    %s368 = scalar_lea.sflag [#allocation3], 1
    %369 = vsyncpa %s368, 1
    %370 = vsyncpa [#allocation6], 1
    %371 = vsyncpa [#allocation4], 1
    %s372 = scalar_lea.sflag [#allocation4], 1
    %373 = vsyncpa %s372, 1

</llo_original>
